<compile_context>
chip_gen: v6e
topology: v6e:2x2x1
jax: 0.10.0
libtpu: 0.0.40
codegen_flags: <defaults>
</compile_context>

<pallas_src>
import math

import jax
import jax.numpy as jnp
from jax.experimental import pallas as pl
from jax.experimental.pallas import tpu as pltpu


def _round_up(x, m):
    return ((x + m - 1) // m) * m


def default_compute_dtype():
    """Per-generation MXU input dtype: bf16 on v6e/v7x, f32 on v5e/unknown."""
    try:
        kind = jax.devices()[0].device_kind.lower()
    except Exception:
        return jnp.float32
    return jnp.bfloat16 if ("v6" in kind or "v7" in kind) else jnp.float32


# --------------------------------------------------------------------------
# One-time parameter preparation (hoisted out of the per-step path).
# --------------------------------------------------------------------------
def prepare_params(w_i2h, b_i2h, w_i2o, b_i2o, compute_dtype=jnp.float32):
    """Fuse i2h/i2o into one lane-padded weight, split by input vs hidden.

    PyTorch layout:  w_i2h [H, I+H], w_i2o [O, I+H];  y = cat(x,h) @ W.T + b.
    Fused layout  :  columns [0:H) -> new hidden, [Hpad:Hpad+O) -> output.
    Padded lanes/rows and padded bias entries are ZERO (required so padded
    hidden lanes stay zero through the linear recurrence).
    """
    H, fan_in = w_i2h.shape
    O = w_i2o.shape[0]
    I = fan_in - H
    Hpad = _round_up(H, 128)
    Opad = _round_up(O, 128)
    F = Hpad + Opad

    wx = jnp.zeros((I, F), jnp.float32)
    wx = wx.at[:, :H].set(w_i2h[:, :I].T)
    wx = wx.at[:, Hpad:Hpad + O].set(w_i2o[:, :I].T)

    wh = jnp.zeros((Hpad, F), jnp.float32)          # padded rows = 0
    wh = wh.at[:H, :H].set(w_i2h[:, I:].T)
    wh = wh.at[:H, Hpad:Hpad + O].set(w_i2o[:, I:].T)

    b = jnp.zeros((1, F), jnp.float32)
    b = b.at[0, :H].set(b_i2h)
    b = b.at[0, Hpad:Hpad + O].set(b_i2o)

    wx = wx.astype(compute_dtype)
    wh = wh.astype(compute_dtype)
    return {
        "wx": wx,                    # [I, F]
        "wh": wh,                    # [Hpad, F]   (sequence kernel)
        "wh_step": wh[:H, :],        # [H, F]      (single-step kernel)
        "b": b,                      # [1, F]      f32 (added post-accumulation)
        "H": H, "O": O, "I": I, "Hpad": Hpad, "Opad": Opad, "F": F,
    }


# --------------------------------------------------------------------------
# Batched, time-independent input projection: xproj = x @ Wx + b  (one matmul)
# --------------------------------------------------------------------------
def xproj_kernel(x_ref, wx_ref, b_ref, o_ref):
    o_ref[...] = (
        jnp.dot(x_ref[...], wx_ref[...], preferred_element_type=jnp.float32)
        + b_ref[...]
    )


def x_projection(x2d, wx, b):
    """(M, I) @ (I, F) + b in a single VMEM-resident pallas_call.
    # TODO(synk): tile over M (and F) with a grid once M*F stops fitting VMEM.
    """
    M = x2d.shape[0]
    F = wx.shape[1]
    return pl.pallas_call(
        xproj_kernel,
        out_shape=jax.ShapeDtypeStruct((M, F), jnp.float32),
        in_specs=[pl.BlockSpec(memory_space=pltpu.VMEM)] * 3,
        out_specs=pl.BlockSpec(memory_space=pltpu.VMEM),
    )(x2d.astype(wx.dtype), wx, b)


# --------------------------------------------------------------------------
# Single-step kernel: one fused, lane-dense matmul.  (Module forward API.)
# NOTE: never drive this in an outer Python/scan loop for multi-step
# inference -- use rnn_sequence instead (weights + h stay VMEM-resident).
# --------------------------------------------------------------------------
def rnn_step_kernel(x_ref, h_ref, wx_ref, wh_ref, b_ref, fused_ref):
    fused = (
        jnp.dot(x_ref[...], wx_ref[...], preferred_element_type=jnp.float32)
        + jnp.dot(h_ref[...], wh_ref[...], preferred_element_type=jnp.float32)
        + b_ref[...]
    )
    fused_ref[...] = fused.astype(fused_ref.dtype)


def rnn_forward(x, h, params):
    """RNN.forward(input, hidden) -> (output, new_hidden)."""
    wx, wh, b = params["wx"], params["wh_step"], params["b"]
    H, O, Hpad, F = params["H"], params["O"], params["Hpad"], params["F"]
    B = x.shape[0]
    cdt = wx.dtype

    slab = pl.pallas_call(
        rnn_step_kernel,
        out_shape=jax.ShapeDtypeStruct((B, F), jnp.float32),
        in_specs=[pl.BlockSpec(memory_space=pltpu.VMEM)] * 5,
        out_specs=pl.BlockSpec(memory_space=pltpu.VMEM),
    )(x.astype(cdt), h.astype(cdt), wx, wh, b)

    new_hidden = slab[:, :H].astype(x.dtype)
    output = slab[:, Hpad:Hpad + O].astype(x.dtype)
    return output, new_hidden


# --------------------------------------------------------------------------
# Sequence kernel: Tb timesteps per grid step, recurrence only does h @ Wh.
# --------------------------------------------------------------------------
def rnn_seq_kernel(xproj_ref, h0_ref, wh_ref, out_ref, hfin_ref):
    # hfin_ref has a constant index_map -> its block is VMEM-resident for the
    # whole grid and doubles as the cross-grid-step hidden-state carry
    # (resident-output-as-accumulator pattern).
    @pl.when(pl.program_id(0) == 0)
    def _():
        hfin_ref[...] = h0_ref[...]

    tb = xproj_ref.shape[0]
    hpad = hfin_ref.shape[1]
    wh = wh_ref[...]                       # [Hpad, F], resident (load once)

    def step(i, h):                        # h: (B, Hpad) f32 carry in vregs
        fused = xproj_ref[i] + jnp.dot(
            h.astype(wh.dtype), wh, preferred_element_type=jnp.float32)
        out_ref[i] = fused[:, hpad:]       # lane-dense store (Opad % 128 == 0)
        return fused[:, :hpad]             # lane-tile-aligned split -> new h

    hfin_ref[...] = jax.lax.fori_loop(0, tb, step, hfin_ref[...], unroll=True)


def rnn_sequence(xs, h0, params, tb=None):
    """Apply the cell over xs[t] for t in range(T). Returns (outputs, h_final).

    Weights stay VMEM-resident for the whole sequence; the hidden state never
    round-trips to HBM between timesteps.
    """
    wx, wh, b = params["wx"], params["wh"], params["b"]
    H, O, Hpad, Opad, F = (params["H"], params["O"], params["Hpad"],
                           params["Opad"], params["F"])
    T, B, I = xs.shape
    if tb is None:
        # TODO(synk): tune Tb against VMEM for realistic T/B; here T is tiny so
        # Tb = T -> grid=(1,) and all per-grid-step overhead is paid once.
        tb = T if T <= 32 else math.gcd(T, 32)
    assert T % tb == 0, "T must be a multiple of the time block Tb"

    # (1) time-independent projection as ONE batched matmul; bias folded in.
    xproj = x_projection(xs.reshape(T * B, I), wx, b).reshape(T, B, F)
    h0_pad = jnp.pad(h0, ((0, 0), (0, Hpad - H))).astype(jnp.float32)   # once

    outs, h_fin = pl.pallas_call(
        rnn_seq_kernel,
        out_shape=(
            jax.ShapeDtypeStruct((T, B, Opad), jnp.float32),
            jax.ShapeDtypeStruct((B, Hpad), jnp.float32),
        ),
        grid_spec=pltpu.PrefetchScalarGridSpec(
            num_scalar_prefetch=0,
            grid=(T // tb,),
            in_specs=[
                pl.BlockSpec((tb, B, F), lambda t: (t, 0, 0)),    # xproj streamed
                pl.BlockSpec((B, Hpad), lambda t: (0, 0)),        # h0 resident
                pl.BlockSpec((Hpad, F), lambda t: (0, 0)),        # Wh resident
                # TODO(synk): at realistic H/I on v7x (64 MiB VMEM) use bf16
                # weights + pipeline_mode=pl.Buffered(1) on the constant
                # index_map specs and raise vmem_limit_bytes explicitly.
            ],
            out_specs=(
                pl.BlockSpec((tb, B, Opad), lambda t: (t, 0, 0)),  # per-block out
                pl.BlockSpec((B, Hpad), lambda t: (0, 0)),         # hidden carry
            ),
        ),
        # Time is a true dependence chain -> "arbitrary".
        # TODO(synk): on v7x, once B >= 16 f32 rows, add a second "parallel"
        # grid axis over BATCH tiles (not time / out-features) for the 2 TCs.
        compiler_params=pltpu.CompilerParams(
            dimension_semantics=("arbitrary",)),
    )(xproj, h0_pad, wh)

    return outs[:, :, :O].astype(xs.dtype), h_fin[:, :H].astype(xs.dtype)


# --------------------------------------------------------------------------
if __name__ == "__main__":
    batch = 2
    input_size = 32
    hidden_size = 32
    output_size = 16
    seq_len = 8

    key = jax.random.PRNGKey(0)
    kx, ks, k1, k2, k3, k4 = jax.random.split(key, 6)

    x = jax.random.normal(kx, (batch, input_size), dtype=jnp.float32)
    xs = jax.random.normal(ks, (seq_len, batch, input_size), dtype=jnp.float32)
    h0 = jnp.zeros((batch, hidden_size), dtype=jnp.float32)   # initHidden()

    fan_in = input_size + hidden_size
    bound = 1.0 / (fan_in ** 0.5)
    w_i2h = jax.random.uniform(k1, (hidden_size, fan_in), jnp.float32, -bound, bound)
    b_i2h = jax.random.uniform(k2, (hidden_size,), jnp.float32, -bound, bound)
    w_i2o = jax.random.uniform(k3, (output_size, fan_in), jnp.float32, -bound, bound)
    b_i2o = jax.random.uniform(k4, (output_size,), jnp.float32, -bound, bound)

    # ---- pure-JAX reference (same math as torch forward) -----------------
    def ref_step(xi, hi):
        comb = jnp.concatenate([xi, hi], axis=1)
        return comb @ w_i2o.T + b_i2o, comb @ w_i2h.T + b_i2h

    ref_o1, ref_h1 = ref_step(x, h0)
    h_ref = h0
    ref_outs = []
    for t in range(seq_len):
        o_t, h_ref = ref_step(xs[t], h_ref)
        ref_outs.append(o_t)
    ref_outs = jnp.stack(ref_outs, axis=0)

    # Per-generation default available via default_compute_dtype(); tests
    # below exercise BOTH dtypes deterministically regardless of the chip.
    params_f32 = prepare_params(w_i2h, b_i2h, w_i2o, b_i2o, jnp.float32)
    params_bf16 = prepare_params(w_i2h, b_i2h, w_i2o, b_i2o, jnp.bfloat16)

    # ---- single step, f32 (strict check) ----------------------------------
    out, new_h = jax.jit(lambda a, b_: rnn_forward(a, b_, params_f32))(x, h0)
    jax.block_until_ready((out, new_h))
    assert out.shape == (batch, output_size) and new_h.shape == (batch, hidden_size)
    assert jnp.allclose(out, ref_o1, atol=1e-5)
    assert jnp.allclose(new_h, ref_h1, atol=1e-5)

    # ---- single step, bf16 MXU inputs (loose check) ------------------------
    out_b, new_h_b = jax.jit(lambda a, b_: rnn_forward(a, b_, params_bf16))(x, h0)
    jax.block_until_ready((out_b, new_h_b))
    assert jnp.allclose(out_b, ref_o1, atol=5e-2)
    assert jnp.allclose(new_h_b, ref_h1, atol=5e-2)

    # ---- full sequence, f32 (strict-ish check) -----------------------------
    outs, h_fin = jax.jit(lambda a, b_: rnn_sequence(a, b_, params_f32))(xs, h0)
    jax.block_until_ready((outs, h_fin))
    assert outs.shape == (seq_len, batch, output_size)
    assert h_fin.shape == (batch, hidden_size)
    assert jnp.allclose(outs, ref_outs, atol=1e-4, rtol=1e-4)
    assert jnp.allclose(h_fin, h_ref, atol=1e-4, rtol=1e-4)

    # ---- full sequence, bf16 fast path (v6e/v7x), loose check ---------------
    # Hidden carry stays f32; only the MXU inputs are bf16, so error growth
    # with T is bounded to input/weight rounding per step.
    outs_b, h_fin_b = jax.jit(lambda a, b_: rnn_sequence(a, b_, params_bf16))(xs, h0)
    jax.block_until_ready((outs_b, h_fin_b))
    assert jnp.allclose(outs_b, ref_outs, atol=1e-1)
    assert jnp.allclose(h_fin_b, h_ref, atol=1e-1)

    print("KERNEL_OK")
</pallas_src>

<mosaic_0001>
module attributes {stable_mosaic.version = 11 : i64} {
  func.func @rnn_step_kernel(%arg0: memref<2x32xf32, #tpu.memory_space<vmem>>, %arg1: memref<2x32xf32, #tpu.memory_space<vmem>>, %arg2: memref<32x256xf32, #tpu.memory_space<vmem>>, %arg3: memref<32x256xf32, #tpu.memory_space<vmem>>, %arg4: memref<1x256xf32, #tpu.memory_space<vmem>>, %arg5: memref<2x256xf32, #tpu.memory_space<vmem>>) attributes {dimension_semantics = [], scalar_prefetch = 0 : i64, scratch_operands = 0 : i64, tpu.core_type = #tpu.core_type<tc>} {
    %c0 = arith.constant 0 : index
    %c0_0 = arith.constant 0 : index
    %0 = vector.load %arg0[%c0, %c0_0] : memref<2x32xf32, #tpu.memory_space<vmem>>, vector<2x32xf32>
    %c0_1 = arith.constant 0 : index
    %c0_2 = arith.constant 0 : index
    %1 = vector.load %arg2[%c0_1, %c0_2] : memref<32x256xf32, #tpu.memory_space<vmem>>, vector<32x256xf32>
    %cst = arith.constant dense<0.000000e+00> : vector<2x256xf32>
    %2 = tpu.matmul %0, %1, %cst {dimension_numbers = #tpu.dot_dimension_numbers<[1], [0], [0], [1], [0, 0, 1, 1], [], []>} : vector<2x32xf32>, vector<32x256xf32>, vector<2x256xf32> -> vector<2x256xf32>
    %c0_3 = arith.constant 0 : index
    %c0_4 = arith.constant 0 : index
    %3 = vector.load %arg1[%c0_3, %c0_4] : memref<2x32xf32, #tpu.memory_space<vmem>>, vector<2x32xf32>
    %c0_5 = arith.constant 0 : index
    %c0_6 = arith.constant 0 : index
    %4 = vector.load %arg3[%c0_5, %c0_6] : memref<32x256xf32, #tpu.memory_space<vmem>>, vector<32x256xf32>
    %cst_7 = arith.constant dense<0.000000e+00> : vector<2x256xf32>
    %5 = tpu.matmul %3, %4, %cst_7 {dimension_numbers = #tpu.dot_dimension_numbers<[1], [0], [0], [1], [0, 0, 1, 1], [], []>} : vector<2x32xf32>, vector<32x256xf32>, vector<2x256xf32> -> vector<2x256xf32>
    %6 = arith.addf %2, %5 : vector<2x256xf32>
    %c0_8 = arith.constant 0 : index
    %c0_9 = arith.constant 0 : index
    %7 = vector.load %arg4[%c0_8, %c0_9] : memref<1x256xf32, #tpu.memory_space<vmem>>, vector<1x256xf32>
    %8 = vector.broadcast %7 : vector<1x256xf32> to vector<2x256xf32>
    %9 = arith.addf %6, %8 : vector<2x256xf32>
    %c0_10 = arith.constant 0 : index
    %c0_11 = arith.constant 0 : index
    %10 = vector.load %arg5[%c0_10, %c0_11] : memref<2x256xf32, #tpu.memory_space<vmem>>, vector<2x256xf32>
    tpu.vector_store %arg5[%c0_10, %c0_11], %9 {strides = array<i32>} : memref<2x256xf32, #tpu.memory_space<vmem>>, vector<2x256xf32>,
    return
  }
}

</mosaic_0001>

<llo_original>
// kernel: _lambda_.1
$region0: #{_lambda_.1}
  #allocation0 [shape = 'u32[]', space=smem, size = 0x4, offset = 0x4, fixed_abs, tag = 'smem constant byte address 0x4 - core index']
  #allocation1 [shape = 'u32[144,128]{1,0:T(1,128)}', space=vmem, size = 0x12000, scoped, tag = 'internal scratch']
  %s0 = inlined_call_operand.hbm [shape: f32[2,32], index: 0, kind: input, shape index: {}]
  %s1 = inlined_call_operand.hbm [shape: f32[2,32], index: 1, kind: input, shape index: {}]
  %s2 = inlined_call_operand.hbm [shape: f32[32,256], index: 2, kind: input, shape index: {}]
  %s3 = inlined_call_operand.hbm [shape: f32[32,256], index: 3, kind: input, shape index: {}]
  %s4 = inlined_call_operand.vmem [shape: f32[1,256], index: 4, kind: input, shape index: {}]
  %s5 = inlined_call_operand.vmem [shape: f32[2,256], index: 5, kind: output, shape index: {}]
  %s6 = sld [smem:[#allocation0]]
  $region46: #{_lambda_.1} parent=0
    _
  %s8 = ssub.s32 1, %s6
  %s9 = scalar_select 0, %s8, %s6
  $region1: #{_lambda_.1} parent=0
    #allocation2 [shape = 'u8[1024]{0}', space=vmem, size = 0x400, scoped, tag = 'input window, operand 0, single buffered']
    #allocation3 [shape = 's32[1]{0}', space=sflag, size = 0x4, scoped, tag = 'scoped memory for _lambda_.1']
    #allocation4 [shape = 'u8[1024]{0}', space=vmem, size = 0x400, scoped, tag = 'input window, operand 1, single buffered']
    #allocation5 [shape = 's32[1]{0}', space=sflag, size = 0x4, scoped, tag = 'scoped memory for _lambda_.1']
    #allocation6 [shape = 'u8[32768]{0}', space=vmem, size = 0x8000, scoped, tag = 'input window, operand 2, single buffered']
    #allocation7 [shape = 'u8[32768]{0}', space=vmem, size = 0x8000, scoped, tag = 'input window, operand 3, single buffered']
    #allocation8 [shape = 's32[1]{0}', space=sflag, size = 0x4, scoped, tag = 'scoped memory for _lambda_.1']
    %10 = vsyncpa [#allocation3], 0
    %11 = vsyncpa [#allocation5], 0
    %12 = vsyncpa [#allocation8], 0
    // Predicated region
    $region2: #{_lambda_.1} parent=1 // pred_check
      _
    $region3: #{_lambda_.1} parent=1 // pred_check_branch
      %14 = sbr.rel (0) target = $region5
    $region4: #{_lambda_.1} parent=1 // pred_region
      %s16 = ssub.s32 32, 32
      %17 = vsyncadd [#allocation3], %s16
      %s19 = sshll.u32 [#allocation2], 4
      %s20 = int_to_ptr.vmem [resolvable:$true] %s19
      %22 = dma.hbm_to_vmem [thread:$0]  %s0, 32, %s20, [#allocation3]
    $region5: #{_lambda_.1} parent=1 // pred_fallthru
      _
    // Predicated region
    $region6: #{_lambda_.1} parent=1 // pred_check
      _
    $region7: #{_lambda_.1} parent=1 // pred_check_branch
      %24 = sbr.rel (0) target = $region9
    $region8: #{_lambda_.1} parent=1 // pred_region
      %s26 = ssub.s32 32, 32
      %27 = vsyncadd [#allocation5], %s26
      %s29 = sshll.u32 [#allocation4], 4
      %s30 = int_to_ptr.vmem [resolvable:$true] %s29
      %32 = dma.hbm_to_vmem [thread:$0]  %s1, 32, %s30, [#allocation5]
    $region9: #{_lambda_.1} parent=1 // pred_fallthru
      _
    // Predicated region
    $region10: #{_lambda_.1} parent=1 // pred_check
      _
    $region11: #{_lambda_.1} parent=1 // pred_check_branch
      %34 = sbr.rel (0) target = $region13
    $region12: #{_lambda_.1} parent=1 // pred_region
      %s36 = ssub.s32 1024, 1024
      %37 = vsyncadd [#allocation5], %s36
      %s38 = sshll.u32 [#allocation6], 4
      %s39 = int_to_ptr.vmem [resolvable:$true] %s38
      %44 = dma.hbm_to_vmem [thread:$0]  %s2, 1024, %s39, [#allocation5], 256, 256, 16
    $region13: #{_lambda_.1} parent=1 // pred_fallthru
      _
    // Predicated region
    $region14: #{_lambda_.1} parent=1 // pred_check
      _
    $region15: #{_lambda_.1} parent=1 // pred_check_branch
      %46 = sbr.rel (0) target = $region17
    $region16: #{_lambda_.1} parent=1 // pred_region
      %s48 = ssub.s32 1024, 1024
      %49 = vsyncadd [#allocation8], %s48
      %s50 = sshll.u32 [#allocation7], 4
      %s51 = int_to_ptr.vmem [resolvable:$true] %s50
      %56 = dma.hbm_to_vmem [thread:$0]  %s3, 1024, %s51, [#allocation8], 256, 256, 16
    $region17: #{_lambda_.1} parent=1 // pred_fallthru
      _
    // Predicated region
    $region18: #{_lambda_.1} parent=1 // pred_check
      _
    $region19: #{_lambda_.1} parent=1 // pred_check_branch
      %58 = sbr.rel (0) target = $region21
    $region20: #{_lambda_.1} parent=1 // pred_region
      _
    $region21: #{_lambda_.1} parent=1 // pred_fallthru
      _
    // Predicated region
    $region22: #{_lambda_.1} parent=1 // pred_check
      _
    $region23: #{_lambda_.1} parent=1 // pred_check_branch
      %60 = sbr.rel (0) target = $region25
    $region24: #{_lambda_.1} parent=1 // pred_region
      %61 = dma.done [#allocation3], 32
    $region25: #{_lambda_.1} parent=1 // pred_fallthru
      _
    // Predicated region
    $region26: #{_lambda_.1} parent=1 // pred_check
      _
    $region27: #{_lambda_.1} parent=1 // pred_check_branch
      %63 = sbr.rel (0) target = $region29
    $region28: #{_lambda_.1} parent=1 // pred_region
      %64 = dma.done [#allocation5], 32
    $region29: #{_lambda_.1} parent=1 // pred_fallthru
      _
    // Predicated region
    $region30: #{_lambda_.1} parent=1 // pred_check
      _
    $region31: #{_lambda_.1} parent=1 // pred_check_branch
      %66 = sbr.rel (0) target = $region33
    $region32: #{_lambda_.1} parent=1 // pred_region
      %67 = dma.done [#allocation5], 1024
    $region33: #{_lambda_.1} parent=1 // pred_fallthru
      _
    // Predicated region
    $region34: #{_lambda_.1} parent=1 // pred_check
      _
    $region35: #{_lambda_.1} parent=1 // pred_check_branch
      %69 = sbr.rel (0) target = $region37
    $region36: #{_lambda_.1} parent=1 // pred_region
      %70 = dma.done [#allocation8], 1024
    $region37: #{_lambda_.1} parent=1 // pred_fallthru
      _
    %v71 = vld [vmem:[#allocation2] sm:$0x3]
    %v72 = vld [vmem:[#allocation6] sm:$0xff]
    %v73 = vld [vmem:[#allocation6 + $0x8] sm:$0xff]
    %v74 = vld [vmem:[#allocation6 + $0x10] sm:$0xff]
    %v75 = vld [vmem:[#allocation6 + $0x18] sm:$0xff]
    %v76 = vld [vmem:[#allocation6 + $0x20] sm:$0xff]
    %v77 = vld [vmem:[#allocation6 + $0x28] sm:$0xff]
    %v78 = vld [vmem:[#allocation6 + $0x30] sm:$0xff]
    %v79 = vld [vmem:[#allocation6 + $0x38] sm:$0xff]
    %v80 = vld [vmem:[#allocation4] sm:$0x3]
    %v81 = vld [vmem:[#allocation7] sm:$0xff]
    %v82 = vld [vmem:[#allocation7 + $0x8] sm:$0xff]
    %v83 = vld [vmem:[#allocation7 + $0x10] sm:$0xff]
    %v84 = vld [vmem:[#allocation7 + $0x18] sm:$0xff]
    %v85 = vld [vmem:[#allocation7 + $0x20] sm:$0xff]
    %v86 = vld [vmem:[#allocation7 + $0x28] sm:$0xff]
    %v87 = vld [vmem:[#allocation7 + $0x30] sm:$0xff]
    %v88 = vld [vmem:[#allocation7 + $0x38] sm:$0xff]
    %vm89 = vcmask 261120
    %v91 = vsel %vm89, %v80, 0
    %93 = vmatprep.subr.mxu0 0.0
    %94 = vmatpush1.msra.mxu0 0.0
    %95 = vmatprep.subr.mxu0 0.0
    %96 = vmatpush1.msra.mxu0 0.0
    %97 = vmatprep.subr.mxu0 0.0
    %98 = vmatpush1.msra.mxu0 0.0
    %99 = vmatprep.subr.mxu0 0.0
    %100 = vmatpush1.msra.mxu0 0.0
    %101 = vmatprep.subr.mxu0 0.0
    %102 = vmatpush1.msra.mxu0 0.0
    %103 = vmatprep.subr.mxu0 0.0
    %104 = vmatpush1.msra.mxu0 0.0
    %105 = vmatprep.subr.mxu0 0.0
    %106 = vmatpush1.msra.mxu0 0.0
    %107 = vmatprep.subr.mxu0 0.0
    %108 = vmatpush1.msra.mxu0 0.0
    %109 = vmatprep.subr.mxu0 0.0
    %110 = vmatpush1.msra.mxu0 0.0
    %111 = vmatprep.subr.mxu0 0.0
    %112 = vmatpush1.msra.mxu0 0.0
    %113 = vmatprep.subr.mxu0 0.0
    %114 = vmatpush1.msra.mxu0 0.0
    %115 = vmatprep.subr.mxu0 0.0
    %116 = vmatpush1.msra.mxu0 0.0
    %117 = vmatprep.subr.mxu0 %v88
    %118 = vmatpush1.msra.mxu0 %v87
    %119 = vmatprep.subr.mxu0 %v86
    %120 = vmatpush1.msra.mxu0 %v85
    %121 = vmatprep.subr.mxu0 %v84
    %122 = vmatpush1.msra.mxu0 %v83
    %123 = vmatprep.subr.mxu0 %v82
    %124 = vmatpush1.msra.mxu0 %v81
    %125 = vmatprep.subr.mxu0 0.0
    %126 = vmatpush2.msra.mxu0 0.0
    %127 = vmatprep.subr.mxu0 0.0
    %128 = vmatpush2.msra.mxu0 0.0
    %129 = vmatprep.subr.mxu0 0.0
    %130 = vmatpush2.msra.mxu0 0.0
    %131 = vmatprep.subr.mxu0 0.0
    %132 = vmatpush2.msra.mxu0 0.0
    %133 = vmatprep.subr.mxu0 0.0
    %134 = vmatpush2.msra.mxu0 0.0
    %135 = vmatprep.subr.mxu0 0.0
    %136 = vmatpush2.msra.mxu0 0.0
    %137 = vmatprep.subr.mxu0 0.0
    %138 = vmatpush2.msra.mxu0 0.0
    %139 = vmatprep.subr.mxu0 0.0
    %140 = vmatpush2.msra.mxu0 0.0
    %141 = vmatprep.subr.mxu0 0.0
    %142 = vmatpush2.msra.mxu0 0.0
    %143 = vmatprep.subr.mxu0 0.0
    %144 = vmatpush2.msra.mxu0 0.0
    %145 = vmatprep.subr.mxu0 0.0
    %146 = vmatpush2.msra.mxu0 0.0
    %147 = vmatprep.subr.mxu0 0.0
    %148 = vmatpush2.msra.mxu0 0.0
    %149 = vmatprep.subr.mxu0 0.0
    %150 = vmatpush2.msra.mxu0 0.0
    %151 = vmatprep.subr.mxu0 0.0
    %152 = vmatpush2.msra.mxu0 0.0
    %153 = vmatprep.subr.mxu0 0.0
    %154 = vmatpush2.msra.mxu0 0.0
    %155 = vmatprep.subr.mxu0 0.0
    %156 = vmatpush2.msra.mxu0 0.0
    %157 = vmatprep.mubr.f32.mxu0 0.0
    %158 = vmatmul.mubr.f32.gmra.mxu0 %v91
    %v159 = vpop.f32.mrf.mxu0
    %v160 = vadd.f32 0.0, %v159
    %v161 = vpop.f32.mrf.mxu0
    %v162 = vadd.f32 0.0, %v161
    %163 = vdwg.mxu0
    %v165 = vsel %vm89, %v71, 0
    %167 = vmatprep.subr.mxu0 0.0
    %168 = vmatpush1.msra.mxu0 0.0
    %169 = vmatprep.subr.mxu0 0.0
    %170 = vmatpush1.msra.mxu0 0.0
    %171 = vmatprep.subr.mxu0 0.0
    %172 = vmatpush1.msra.mxu0 0.0
    %173 = vmatprep.subr.mxu0 0.0
    %174 = vmatpush1.msra.mxu0 0.0
    %175 = vmatprep.subr.mxu0 0.0
    %176 = vmatpush1.msra.mxu0 0.0
    %177 = vmatprep.subr.mxu0 0.0
    %178 = vmatpush1.msra.mxu0 0.0
    %179 = vmatprep.subr.mxu0 0.0
    %180 = vmatpush1.msra.mxu0 0.0
    %181 = vmatprep.subr.mxu0 0.0
    %182 = vmatpush1.msra.mxu0 0.0
    %183 = vmatprep.subr.mxu0 0.0
    %184 = vmatpush1.msra.mxu0 0.0
    %185 = vmatprep.subr.mxu0 0.0
    %186 = vmatpush1.msra.mxu0 0.0
    %187 = vmatprep.subr.mxu0 0.0
    %188 = vmatpush1.msra.mxu0 0.0
    %189 = vmatprep.subr.mxu0 0.0
    %190 = vmatpush1.msra.mxu0 0.0
    %191 = vmatprep.subr.mxu0 %v79
    %192 = vmatpush1.msra.mxu0 %v78
    %193 = vmatprep.subr.mxu0 %v77
    %194 = vmatpush1.msra.mxu0 %v76
    %195 = vmatprep.subr.mxu0 %v75
    %196 = vmatpush1.msra.mxu0 %v74
    %197 = vmatprep.subr.mxu0 %v73
    %198 = vmatpush1.msra.mxu0 %v72
    %199 = vmatprep.subr.mxu0 0.0
    %200 = vmatpush2.msra.mxu0 0.0
    %201 = vmatprep.subr.mxu0 0.0
    %202 = vmatpush2.msra.mxu0 0.0
    %203 = vmatprep.subr.mxu0 0.0
    %204 = vmatpush2.msra.mxu0 0.0
    %205 = vmatprep.subr.mxu0 0.0
    %206 = vmatpush2.msra.mxu0 0.0
    %207 = vmatprep.subr.mxu0 0.0
    %208 = vmatpush2.msra.mxu0 0.0
    %209 = vmatprep.subr.mxu0 0.0
    %210 = vmatpush2.msra.mxu0 0.0
    %211 = vmatprep.subr.mxu0 0.0
    %212 = vmatpush2.msra.mxu0 0.0
    %213 = vmatprep.subr.mxu0 0.0
    %214 = vmatpush2.msra.mxu0 0.0
    %215 = vmatprep.subr.mxu0 0.0
    %216 = vmatpush2.msra.mxu0 0.0
    %217 = vmatprep.subr.mxu0 0.0
    %218 = vmatpush2.msra.mxu0 0.0
    %219 = vmatprep.subr.mxu0 0.0
    %220 = vmatpush2.msra.mxu0 0.0
    %221 = vmatprep.subr.mxu0 0.0
    %222 = vmatpush2.msra.mxu0 0.0
    %223 = vmatprep.subr.mxu0 0.0
    %224 = vmatpush2.msra.mxu0 0.0
    %225 = vmatprep.subr.mxu0 0.0
    %226 = vmatpush2.msra.mxu0 0.0
    %227 = vmatprep.subr.mxu0 0.0
    %228 = vmatpush2.msra.mxu0 0.0
    %229 = vmatprep.subr.mxu0 0.0
    %230 = vmatpush2.msra.mxu0 0.0
    %231 = vmatprep.mubr.f32.mxu0 0.0
    %232 = vmatmul.mubr.f32.gmra.mxu0 %v165
    %v233 = vpop.f32.mrf.mxu0
    %v234 = vadd.f32 %v160, %v233
    %v235 = vpop.f32.mrf.mxu0
    %v236 = vadd.f32 %v162, %v235
    %237 = vdwg.mxu0
    %v238 = vld [vmem:[%s4] sm:$0x3]
    %v240 = vlaneseq
    %v241 = vshrl.u32 %v240, 7
    %v242 = vsub.s32 0, %v241
    %v243 = vrot.slane %v238, %v242
    %v244 = vlaneseq
    %v245 = vshrl.u32 %v244, 7
    %v246 = vsub.s32 1, %v245
    %v247 = vrot.slane %v238, %v246
    %v250 = vadd.f32 %v234, %v243
    %v251 = vadd.f32 %v236, %v247
    %v254 = vcombine.low %v250, %v251
    %v256 = vunpack.c.l.s4 1983009808
    %v257 = vunpack.c.0.s8 %v256
    %v258 = vlaneseq
    %v259 = vshrl.u32 %v258, 7
    %v260 = vsub.s32 %v257, %v259
    %v261 = vrot.slane %v254, %v260
    %263 = vst [vmem:[%s5] sm:$0xf] %v261
    // Predicated region
    $region38: #{_lambda_.1} parent=1 // pred_check
      _
    $region39: #{_lambda_.1} parent=1 // pred_check_branch
      %265 = sbr.rel (0) target = $region41
    $region40: #{_lambda_.1} parent=1 // pred_region
      _
    $region41: #{_lambda_.1} parent=1 // pred_fallthru
      _
    // Predicated region
    $region42: #{_lambda_.1} parent=1 // pred_check
      _
    $region43: #{_lambda_.1} parent=1 // pred_check_branch
      %267 = sbr.rel (0) target = $region45
    $region44: #{_lambda_.1} parent=1 // pred_region
      _
    $region45: #{_lambda_.1} parent=1 // pred_fallthru
      _
    %268 = vsyncpa [#allocation3], 1
    %269 = vsyncpa [#allocation5], 1
    %270 = vsyncpa [#allocation8], 1

</llo_original>
